<compile_context>
chip_gen: v5e
topology: v5e:2x2
jax: 0.10.0
libtpu: 0.0.40
codegen_flags: <defaults>
</compile_context>

<pallas_src>
import functools

import jax
import jax.numpy as jnp
from jax.experimental import pallas as pl
from jax.experimental.pallas import tpu as pltpu


def _leaky_relu(x, slope=0.2):
    return jnp.where(x > 0, x, slope * x)


def _round_up(n, m):
    return ((n + m - 1) // m) * m


def discriminator_kernel(x_ref,
                         w1_ref, b1_ref,
                         w2_ref, b2_ref,
                         w3_ref, b3_ref,
                         w4_ref, b4_ref,
                         o_ref,
                         *, out_is_one):
    """Fused 4-layer MLP forward for one batch tile (all weights resident in VMEM).

    x / w1..w4 are bf16; biases f32; all accumulation in f32.
    If out_is_one, w4_ref holds the last layer's weight transposed: (1, hidden).
    """
    x = x_ref[...]                                                        # (TB, 784) bf16

    h = jnp.dot(x, w1_ref[...], preferred_element_type=jnp.float32) + b1_ref[...]
    h = _leaky_relu(h)                                                    # (TB, 4H) f32
    # dropout (eval) -> identity

    h = jnp.dot(h.astype(jnp.bfloat16), w2_ref[...],
                preferred_element_type=jnp.float32) + b2_ref[...]
    h = _leaky_relu(h)                                                    # (TB, 2H) f32

    h = jnp.dot(h.astype(jnp.bfloat16), w3_ref[...],
                preferred_element_type=jnp.float32) + b3_ref[...]
    h = _leaky_relu(h)                                                    # (TB, H) f32

    if out_is_one:
        # N=1 output: avoid a degenerate MXU push; VPU multiply + lane reduce.
        w4_row = w4_ref[...].astype(jnp.float32)                          # (1, H)
        out = jnp.sum(h * w4_row, axis=-1, keepdims=True) + b4_ref[...]   # (TB, 1)
    else:
        out = jnp.dot(h.astype(jnp.bfloat16), w4_ref[...],
                      preferred_element_type=jnp.float32) + b4_ref[...]   # (TB, out)

    o_ref[...] = out.astype(o_ref.dtype)


def discriminator_forward(x, params, *, batch_tile=1024):
    """x: any shape that flattens to (-1, 784); NCHW images included."""
    input_size = params["w1"].shape[0]
    out_size = params["w4"].shape[1]
    out_is_one = (out_size == 1)

    x2d = x.reshape(-1, input_size)
    batch = x2d.shape[0]

    # Adaptive batch tile: big (512-2048 class) for real batches, shrunk to the
    # batch rounded up to a multiple of 8 for tiny test batches.
    tile = max(8, min(_round_up(batch_tile, 8), _round_up(batch, 8)))
    padded = _round_up(batch, tile)

    # bf16 at the boundary: halves HBM traffic on the dominant input stream and
    # hits the native bf16 MXU path; accumulation stays f32 inside the kernel.
    x2d = x2d.astype(jnp.bfloat16)
    if padded != batch:
        x2d = jnp.pad(x2d, ((0, padded - batch), (0, 0)))

    w1 = params["w1"].astype(jnp.bfloat16)
    w2 = params["w2"].astype(jnp.bfloat16)
    w3 = params["w3"].astype(jnp.bfloat16)
    if out_is_one:
        w4 = params["w4"].T.astype(jnp.bfloat16)        # (1, hidden) broadcast row
    else:
        w4 = params["w4"].astype(jnp.bfloat16)          # (hidden, out)
    b1 = params["b1"].astype(jnp.float32)
    b2 = params["b2"].astype(jnp.float32)
    b3 = params["b3"].astype(jnp.float32)
    b4 = params["b4"].astype(jnp.float32)

    grid = (padded // tile,)

    def resident(shape):
        # Full weight/bias tile resident at every grid step (constant index_map).
        return pl.BlockSpec(shape, lambda i: (0, 0))

    kernel = pl.pallas_call(
        functools.partial(discriminator_kernel, out_is_one=out_is_one),
        out_shape=jax.ShapeDtypeStruct((padded, out_size), jnp.float32),
        grid_spec=pltpu.PrefetchScalarGridSpec(
            num_scalar_prefetch=0,
            grid=grid,
            in_specs=[
                pl.BlockSpec((tile, input_size), lambda i: (i, 0)),
                resident(w1.shape), resident(b1.shape),
                resident(w2.shape), resident(b2.shape),
                resident(w3.shape), resident(b3.shape),
                resident(w4.shape), resident(b4.shape),
            ],
            out_specs=pl.BlockSpec((tile, out_size), lambda i: (i, 0)),
        ),
        compiler_params=pltpu.CompilerParams(
            # Batch axis is independent -> megacore sharding on v7x.
            dimension_semantics=("parallel",),
            # Raise v5e's 16 MiB scoped default; equals the v6e/v7x default.
            vmem_limit_bytes=32 << 20,
        ),
    )

    out = kernel(x2d, w1, b1, w2, b2, w3, b3, w4, b4)
    # Padded rows contain garbage (bias + activation on zero rows); slice them off.
    return out[:batch]


def init_params(key, input_size, hidden_dim, output_size):
    """Deterministic init mimicking PyTorch nn.Linear default (uniform +-1/sqrt(fan_in)).
    Weights are stored as (in_features, out_features)."""
    dims = [
        (input_size, hidden_dim * 4),
        (hidden_dim * 4, hidden_dim * 2),
        (hidden_dim * 2, hidden_dim),
        (hidden_dim, output_size),
    ]
    params = {}
    for idx, (fan_in, fan_out) in enumerate(dims, start=1):
        key, kw, kb = jax.random.split(key, 3)
        bound = 1.0 / (fan_in ** 0.5)
        params[f"w{idx}"] = jax.random.uniform(
            kw, (fan_in, fan_out), jnp.float32, minval=-bound, maxval=bound)
        params[f"b{idx}"] = jax.random.uniform(
            kb, (1, fan_out), jnp.float32, minval=-bound, maxval=bound)
    return params


def reference_forward(x, params):
    """Pure-JAX reference mirroring the kernel's bf16-input / f32-accumulate math."""
    h32 = x.reshape(-1, params["w1"].shape[0]).astype(jnp.float32)
    h = h32.astype(jnp.bfloat16)
    for idx in range(1, 4):
        w = params[f"w{idx}"].astype(jnp.bfloat16)
        h32 = jnp.dot(h, w, preferred_element_type=jnp.float32) + params[f"b{idx}"]
        h32 = jnp.where(h32 > 0, h32, 0.2 * h32)
        h = h32.astype(jnp.bfloat16)
    w4 = params["w4"].astype(jnp.bfloat16).astype(jnp.float32)
    return h32 @ w4 + params["b4"]


if __name__ == "__main__":
    INPUT_SIZE = 28 * 28      # 784, fixed by x.view(-1, 28*28)
    HIDDEN_DIM = 32
    OUTPUT_SIZE = 1
    BATCH = 2

    key = jax.random.PRNGKey(0)
    key_x, key_p = jax.random.split(key)

    # MNIST-style NCHW input: (B, 1, 28, 28)
    x = jax.random.normal(key_x, (BATCH, 1, 28, 28), jnp.float32)
    params = init_params(key_p, INPUT_SIZE, HIDDEN_DIM, OUTPUT_SIZE)

    out = discriminator_forward(x, params)
    out = jax.block_until_ready(out)

    ref = reference_forward(x, params)
    assert out.shape == (BATCH, OUTPUT_SIZE), out.shape
    assert jnp.allclose(out, ref, atol=3e-3, rtol=3e-3), (out, ref)

    print("KERNEL_OK")
</pallas_src>

<mosaic_0001>
module attributes {stable_mosaic.version = 11 : i64} {
  func.func @discriminator_kernel(%arg0: i32, %arg1: memref<8x784xbf16, #tpu.memory_space<vmem>>, %arg2: memref<784x128xbf16, #tpu.memory_space<vmem>>, %arg3: memref<1x128xf32, #tpu.memory_space<vmem>>, %arg4: memref<128x64xbf16, #tpu.memory_space<vmem>>, %arg5: memref<1x64xf32, #tpu.memory_space<vmem>>, %arg6: memref<64x32xbf16, #tpu.memory_space<vmem>>, %arg7: memref<1x32xf32, #tpu.memory_space<vmem>>, %arg8: memref<1x32xbf16, #tpu.memory_space<vmem>>, %arg9: memref<1x1xf32, #tpu.memory_space<vmem>>, %arg10: memref<8x1xf32, #tpu.memory_space<vmem>>) attributes {dimension_semantics = [#tpu.dimension_semantics<parallel>], iteration_bounds = array<i64: 1>, scalar_prefetch = 0 : i64, scratch_operands = 0 : i64, tpu.core_type = #tpu.core_type<tc>, window_params = [{transform_indices = @transform_0, window_bounds = array<i64: 8, 784>}, {pipeline_mode = #tpu.pipeline_mode<synchronous>, transform_indices = @transform_1, window_bounds = array<i64: 784, 128>}, {pipeline_mode = #tpu.pipeline_mode<synchronous>, transform_indices = @transform_2, window_bounds = array<i64: 1, 128>}, {pipeline_mode = #tpu.pipeline_mode<synchronous>, transform_indices = @transform_3, window_bounds = array<i64: 128, 64>}, {pipeline_mode = #tpu.pipeline_mode<synchronous>, transform_indices = @transform_4, window_bounds = array<i64: 1, 64>}, {pipeline_mode = #tpu.pipeline_mode<synchronous>, transform_indices = @transform_5, window_bounds = array<i64: 64, 32>}, {pipeline_mode = #tpu.pipeline_mode<synchronous>, transform_indices = @transform_6, window_bounds = array<i64: 1, 32>}, {pipeline_mode = #tpu.pipeline_mode<synchronous>, transform_indices = @transform_7, window_bounds = array<i64: 1, 32>}, {pipeline_mode = #tpu.pipeline_mode<synchronous>, transform_indices = @transform_8, window_bounds = array<i64: 1, 1>}, {transform_indices = @transform_9, window_bounds = array<i64: 8, 1>}]} {
    %c0 = arith.constant 0 : index
    %c0_0 = arith.constant 0 : index
    %0 = vector.load %arg1[%c0, %c0_0] : memref<8x784xbf16, #tpu.memory_space<vmem>>, vector<8x784xbf16>
    %c0_1 = arith.constant 0 : index
    %c0_2 = arith.constant 0 : index
    %1 = vector.load %arg2[%c0_1, %c0_2] : memref<784x128xbf16, #tpu.memory_space<vmem>>, vector<784x128xbf16>
    %cst = arith.constant dense<0.000000e+00> : vector<8x128xf32>
    %2 = tpu.matmul %0, %1, %cst {dimension_numbers = #tpu.dot_dimension_numbers<[1], [0], [0], [1], [0, 0, 1, 1], [], []>} : vector<8x784xbf16>, vector<784x128xbf16>, vector<8x128xf32> -> vector<8x128xf32>
    %c0_3 = arith.constant 0 : index
    %c0_4 = arith.constant 0 : index
    %3 = vector.load %arg3[%c0_3, %c0_4] : memref<1x128xf32, #tpu.memory_space<vmem>>, vector<1x128xf32>
    %4 = vector.broadcast %3 : vector<1x128xf32> to vector<8x128xf32>
    %5 = arith.addf %2, %4 : vector<8x128xf32>
    %cst_5 = arith.constant 0.000000e+00 : f32
    %6 = vector.broadcast %cst_5 : f32 to vector<8x128xf32>
    %7 = arith.cmpf ogt, %5, %6 : vector<8x128xf32>
    %cst_6 = arith.constant 2.000000e-01 : f32
    %8 = vector.broadcast %cst_6 : f32 to vector<8x128xf32>
    %9 = arith.mulf %8, %5 : vector<8x128xf32>
    %10 = arith.select %7, %5, %9 : vector<8x128xi1>, vector<8x128xf32>
    %11 = arith.truncf %10 : vector<8x128xf32> to vector<8x128xbf16>
    %c0_7 = arith.constant 0 : index
    %c0_8 = arith.constant 0 : index
    %12 = vector.load %arg4[%c0_7, %c0_8] : memref<128x64xbf16, #tpu.memory_space<vmem>>, vector<128x64xbf16>
    %cst_9 = arith.constant dense<0.000000e+00> : vector<8x64xf32>
    %13 = tpu.matmul %11, %12, %cst_9 {dimension_numbers = #tpu.dot_dimension_numbers<[1], [0], [0], [1], [0, 0, 1, 1], [], []>} : vector<8x128xbf16>, vector<128x64xbf16>, vector<8x64xf32> -> vector<8x64xf32>
    %c0_10 = arith.constant 0 : index
    %c0_11 = arith.constant 0 : index
    %14 = vector.load %arg5[%c0_10, %c0_11] : memref<1x64xf32, #tpu.memory_space<vmem>>, vector<1x64xf32>
    %15 = vector.broadcast %14 : vector<1x64xf32> to vector<8x64xf32>
    %16 = arith.addf %13, %15 : vector<8x64xf32>
    %cst_12 = arith.constant 0.000000e+00 : f32
    %17 = vector.broadcast %cst_12 : f32 to vector<8x64xf32>
    %18 = arith.cmpf ogt, %16, %17 : vector<8x64xf32>
    %cst_13 = arith.constant 2.000000e-01 : f32
    %19 = vector.broadcast %cst_13 : f32 to vector<8x64xf32>
    %20 = arith.mulf %19, %16 : vector<8x64xf32>
    %21 = arith.select %18, %16, %20 : vector<8x64xi1>, vector<8x64xf32>
    %22 = arith.truncf %21 : vector<8x64xf32> to vector<8x64xbf16>
    %c0_14 = arith.constant 0 : index
    %c0_15 = arith.constant 0 : index
    %23 = vector.load %arg6[%c0_14, %c0_15] : memref<64x32xbf16, #tpu.memory_space<vmem>>, vector<64x32xbf16>
    %cst_16 = arith.constant dense<0.000000e+00> : vector<8x32xf32>
    %24 = tpu.matmul %22, %23, %cst_16 {dimension_numbers = #tpu.dot_dimension_numbers<[1], [0], [0], [1], [0, 0, 1, 1], [], []>} : vector<8x64xbf16>, vector<64x32xbf16>, vector<8x32xf32> -> vector<8x32xf32>
    %c0_17 = arith.constant 0 : index
    %c0_18 = arith.constant 0 : index
    %25 = vector.load %arg7[%c0_17, %c0_18] : memref<1x32xf32, #tpu.memory_space<vmem>>, vector<1x32xf32>
    %26 = vector.broadcast %25 : vector<1x32xf32> to vector<8x32xf32>
    %27 = arith.addf %24, %26 : vector<8x32xf32>
    %cst_19 = arith.constant 0.000000e+00 : f32
    %28 = vector.broadcast %cst_19 : f32 to vector<8x32xf32>
    %29 = arith.cmpf ogt, %27, %28 : vector<8x32xf32>
    %cst_20 = arith.constant 2.000000e-01 : f32
    %30 = vector.broadcast %cst_20 : f32 to vector<8x32xf32>
    %31 = arith.mulf %30, %27 : vector<8x32xf32>
    %32 = arith.select %29, %27, %31 : vector<8x32xi1>, vector<8x32xf32>
    %c0_21 = arith.constant 0 : index
    %c0_22 = arith.constant 0 : index
    %33 = vector.load %arg8[%c0_21, %c0_22] : memref<1x32xbf16, #tpu.memory_space<vmem>>, vector<1x32xbf16>
    %34 = arith.extf %33 : vector<1x32xbf16> to vector<1x32xf32>
    %35 = vector.broadcast %34 : vector<1x32xf32> to vector<8x32xf32>
    %36 = arith.mulf %32, %35 : vector<8x32xf32>
    %cst_23 = arith.constant dense<0.000000e+00> : vector<8xf32>
    %37 = vector.multi_reduction <add>, %36, %cst_23 [1] : vector<8x32xf32> to vector<8xf32>
    %38 = vector.shape_cast %37 : vector<8xf32> to vector<8x1xf32>
    %c0_24 = arith.constant 0 : index
    %c0_25 = arith.constant 0 : index
    %39 = vector.load %arg9[%c0_24, %c0_25] : memref<1x1xf32, #tpu.memory_space<vmem>>, vector<1x1xf32>
    %40 = vector.broadcast %39 : vector<1x1xf32> to vector<8x1xf32>
    %41 = arith.addf %38, %40 : vector<8x1xf32>
    %c0_26 = arith.constant 0 : index
    %c0_27 = arith.constant 0 : index
    %42 = vector.load %arg10[%c0_26, %c0_27] : memref<8x1xf32, #tpu.memory_space<vmem>>, vector<8x1xf32>
    tpu.vector_store %arg10[%c0_26, %c0_27], %41 {strides = array<i32>} : memref<8x1xf32, #tpu.memory_space<vmem>>, vector<8x1xf32>,
    return
  }
  func.func @transform_0(%arg0: i32) -> (i32, i32) {
    %c0_i32 = arith.constant 0 : i32
    %c0_i32_0 = arith.constant 0 : i32
    return %arg0, %c0_i32 : i32, i32
  }
  func.func @transform_1(%arg0: i32) -> (i32, i32) {
    %c0_i32 = arith.constant 0 : i32
    %c0_i32_0 = arith.constant 0 : i32
    %c0_i32_1 = arith.constant 0 : i32
    return %c0_i32, %c0_i32_0 : i32, i32
  }
  func.func @transform_2(%arg0: i32) -> (i32, i32) {
    %c0_i32 = arith.constant 0 : i32
    %c0_i32_0 = arith.constant 0 : i32
    %c0_i32_1 = arith.constant 0 : i32
    return %c0_i32, %c0_i32_0 : i32, i32
  }
  func.func @transform_3(%arg0: i32) -> (i32, i32) {
    %c0_i32 = arith.constant 0 : i32
    %c0_i32_0 = arith.constant 0 : i32
    %c0_i32_1 = arith.constant 0 : i32
    return %c0_i32, %c0_i32_0 : i32, i32
  }
  func.func @transform_4(%arg0: i32) -> (i32, i32) {
    %c0_i32 = arith.constant 0 : i32
    %c0_i32_0 = arith.constant 0 : i32
    %c0_i32_1 = arith.constant 0 : i32
    return %c0_i32, %c0_i32_0 : i32, i32
  }
  func.func @transform_5(%arg0: i32) -> (i32, i32) {
    %c0_i32 = arith.constant 0 : i32
    %c0_i32_0 = arith.constant 0 : i32
    %c0_i32_1 = arith.constant 0 : i32
    return %c0_i32, %c0_i32_0 : i32, i32
  }
  func.func @transform_6(%arg0: i32) -> (i32, i32) {
    %c0_i32 = arith.constant 0 : i32
    %c0_i32_0 = arith.constant 0 : i32
    %c0_i32_1 = arith.constant 0 : i32
    return %c0_i32, %c0_i32_0 : i32, i32
  }
  func.func @transform_7(%arg0: i32) -> (i32, i32) {
    %c0_i32 = arith.constant 0 : i32
    %c0_i32_0 = arith.constant 0 : i32
    %c0_i32_1 = arith.constant 0 : i32
    return %c0_i32, %c0_i32_0 : i32, i32
  }
  func.func @transform_8(%arg0: i32) -> (i32, i32) {
    %c0_i32 = arith.constant 0 : i32
    %c0_i32_0 = arith.constant 0 : i32
    %c0_i32_1 = arith.constant 0 : i32
    return %c0_i32, %c0_i32_0 : i32, i32
  }
  func.func @transform_9(%arg0: i32) -> (i32, i32) {
    %c0_i32 = arith.constant 0 : i32
    %c0_i32_0 = arith.constant 0 : i32
    return %arg0, %c0_i32 : i32, i32
  }
}

</mosaic_0001>

<llo_original>
// kernel: tpu_custom_call.1
$region0: #{tpu_custom_call.1}
  #allocation0 [shape = 'u32[]', space=smem, size = 0x4, offset = 0x4, fixed_abs, tag = 'smem constant byte address 0x4 - core index']
  #allocation1 [shape = 'u32[72,128]{1,0:T(1,128)}', space=vmem, size = 0x9000, scoped, tag = 'internal scratch']
  #allocation2 [shape = 'f32[1,1]{1,0:T(1,128)S(1)}', space=vmem, size = 0x200, scoped, tag = 'scoped memory for tpu_custom_call.1']
  %s0 = inlined_call_operand.vmem [shape: bf16[8,784], index: 0, kind: input, shape index: {}]
  %s1 = inlined_call_operand.hbm [shape: bf16[784,128], index: 1, kind: input, shape index: {}]
  %s2 = inlined_call_operand.vmem [shape: f32[1,128], index: 2, kind: input, shape index: {}]
  %s3 = inlined_call_operand.vmem [shape: bf16[128,64], index: 3, kind: input, shape index: {}]
  %s4 = inlined_call_operand.vmem [shape: f32[1,64], index: 4, kind: input, shape index: {}]
  %s5 = inlined_call_operand.vmem [shape: bf16[64,32], index: 5, kind: input, shape index: {}]
  %s6 = inlined_call_operand.vmem [shape: f32[1,32], index: 6, kind: input, shape index: {}]
  %s7 = inlined_call_operand.vmem [shape: bf16[1,32], index: 7, kind: input, shape index: {}]
  %s8 = inlined_call_operand.<no memory space> [shape: f32[1,1], index: 8, kind: input, shape index: {}]
  %s9 = inlined_call_operand.vmem [shape: f32[8,1], index: 9, kind: output, shape index: {}]
  %s10 = sld [smem:[#allocation0]]
  $region50: #{tpu_custom_call.1} parent=0
    _
  %s12 = ssub.s32 1, %s10
  %s13 = scalar_select 0, %s12, %s10
  %v14 = vstv %s8
  %15 = vst [vmem:[#allocation2] sm:$0x1] %v14
  $region1: #{tpu_custom_call.1} parent=0
    #allocation3 [shape = 'u8[200704]{0}', space=vmem, size = 0x31000, scoped, tag = 'input window, operand 1, single buffered']
    #allocation4 [shape = 's32[1]{0}', space=sflag, size = 0x4, scoped, tag = 'scoped memory for tpu_custom_call.1']
    %16 = vsyncpa [#allocation4], 0
    // Predicated region
    $region2: #{tpu_custom_call.1} parent=1 // pred_check
      _
    $region3: #{tpu_custom_call.1} parent=1 // pred_check_branch
      %18 = sbr.rel (0) target = $region5
    $region4: #{tpu_custom_call.1} parent=1 // pred_region
      _
    $region5: #{tpu_custom_call.1} parent=1 // pred_fallthru
      _
    // Predicated region
    $region6: #{tpu_custom_call.1} parent=1 // pred_check
      _
    $region7: #{tpu_custom_call.1} parent=1 // pred_check_branch
      %20 = sbr.rel (0) target = $region9
    $region8: #{tpu_custom_call.1} parent=1 // pred_region
      %22 = vsyncadd [#allocation4], 0
      %s23 = sshll.u32 %s1, 4
      %s24 = int_to_ptr.hbm [resolvable:$true] %s23
      %s25 = sshll.u32 [#allocation3], 4
      %s26 = int_to_ptr.vmem [resolvable:$true] %s25
      %31 = dma.hbm_to_vmem [thread:$0]  %s24, 6272, %s26, [#allocation4], 64, 64, 4
    $region9: #{tpu_custom_call.1} parent=1 // pred_fallthru
      _
    // Predicated region
    $region10: #{tpu_custom_call.1} parent=1 // pred_check
      _
    $region11: #{tpu_custom_call.1} parent=1 // pred_check_branch
      %33 = sbr.rel (0) target = $region13
    $region12: #{tpu_custom_call.1} parent=1 // pred_region
      _
    $region13: #{tpu_custom_call.1} parent=1 // pred_fallthru
      _
    // Predicated region
    $region14: #{tpu_custom_call.1} parent=1 // pred_check
      _
    $region15: #{tpu_custom_call.1} parent=1 // pred_check_branch
      %35 = sbr.rel (0) target = $region17
    $region16: #{tpu_custom_call.1} parent=1 // pred_region
      _
    $region17: #{tpu_custom_call.1} parent=1 // pred_fallthru
      _
    // Predicated region
    $region18: #{tpu_custom_call.1} parent=1 // pred_check
      _
    $region19: #{tpu_custom_call.1} parent=1 // pred_check_branch
      %37 = sbr.rel (0) target = $region21
    $region20: #{tpu_custom_call.1} parent=1 // pred_region
      _
    $region21: #{tpu_custom_call.1} parent=1 // pred_fallthru
      _
    // Predicated region
    $region22: #{tpu_custom_call.1} parent=1 // pred_check
      _
    $region23: #{tpu_custom_call.1} parent=1 // pred_check_branch
      %39 = sbr.rel (0) target = $region25
    $region24: #{tpu_custom_call.1} parent=1 // pred_region
      _
    $region25: #{tpu_custom_call.1} parent=1 // pred_fallthru
      _
    // Predicated region
    $region26: #{tpu_custom_call.1} parent=1 // pred_check
      _
    $region27: #{tpu_custom_call.1} parent=1 // pred_check_branch
      %41 = sbr.rel (0) target = $region29
    $region28: #{tpu_custom_call.1} parent=1 // pred_region
      _
    $region29: #{tpu_custom_call.1} parent=1 // pred_fallthru
      _
    // Predicated region
    $region30: #{tpu_custom_call.1} parent=1 // pred_check
      _
    $region31: #{tpu_custom_call.1} parent=1 // pred_check_branch
      %43 = sbr.rel (0) target = $region33
    $region32: #{tpu_custom_call.1} parent=1 // pred_region
      _
    $region33: #{tpu_custom_call.1} parent=1 // pred_fallthru
      _
    // Predicated region
    $region34: #{tpu_custom_call.1} parent=1 // pred_check
      _
    $region35: #{tpu_custom_call.1} parent=1 // pred_check_branch
      %45 = sbr.rel (0) target = $region37
    $region36: #{tpu_custom_call.1} parent=1 // pred_region
      _
    $region37: #{tpu_custom_call.1} parent=1 // pred_fallthru
      _
    // Predicated region
    $region38: #{tpu_custom_call.1} parent=1 // pred_check
      _
    $region39: #{tpu_custom_call.1} parent=1 // pred_check_branch
      %47 = sbr.rel (0) target = $region41
    $region40: #{tpu_custom_call.1} parent=1 // pred_region
      %49 = dma.done [#allocation4], 6272
    $region41: #{tpu_custom_call.1} parent=1 // pred_fallthru
      _
    %v51 = vld [vmem:[%s0] sm:$0xff]
    %v52 = vld [vmem:[%s0 + $0x8] sm:$0xff]
    %v53 = vld [vmem:[%s0 + $0x10] sm:$0xff]
    %v54 = vld [vmem:[%s0 + $0x18] sm:$0xf]
    %v55 = vld [vmem:[#allocation3] sm:$0xf]
    %v56 = vld [vmem:[#allocation3 + $0x4] sm:$0xf]
    %v57 = vld [vmem:[#allocation3 + $0x8] sm:$0xf]
    %v58 = vld [vmem:[#allocation3 + $0xc] sm:$0xf]
    %v59 = vld [vmem:[#allocation3 + $0x10] sm:$0xf]
    %v60 = vld [vmem:[#allocation3 + $0x14] sm:$0xf]
    %v61 = vld [vmem:[#allocation3 + $0x18] sm:$0xf]
    %v62 = vld [vmem:[#allocation3 + $0x1c] sm:$0xf]
    %v63 = vld [vmem:[#allocation3 + $0x20] sm:$0xf]
    %v64 = vld [vmem:[#allocation3 + $0x24] sm:$0xf]
    %v65 = vld [vmem:[#allocation3 + $0x28] sm:$0xf]
    %v66 = vld [vmem:[#allocation3 + $0x2c] sm:$0xf]
    %v67 = vld [vmem:[#allocation3 + $0x30] sm:$0xf]
    %v68 = vld [vmem:[#allocation3 + $0x34] sm:$0xf]
    %v69 = vld [vmem:[#allocation3 + $0x38] sm:$0xf]
    %v70 = vld [vmem:[#allocation3 + $0x3c] sm:$0xf]
    %v71 = vld [vmem:[#allocation3 + $0x40] sm:$0xf]
    %v72 = vld [vmem:[#allocation3 + $0x44] sm:$0xf]
    %v73 = vld [vmem:[#allocation3 + $0x48] sm:$0xf]
    %v74 = vld [vmem:[#allocation3 + $0x4c] sm:$0xf]
    %v75 = vld [vmem:[#allocation3 + $0x50] sm:$0xf]
    %v76 = vld [vmem:[#allocation3 + $0x54] sm:$0xf]
    %v77 = vld [vmem:[#allocation3 + $0x58] sm:$0xf]
    %v78 = vld [vmem:[#allocation3 + $0x5c] sm:$0xf]
    %v79 = vld [vmem:[#allocation3 + $0x60] sm:$0xf]
    %v80 = vld [vmem:[#allocation3 + $0x64] sm:$0xf]
    %v81 = vld [vmem:[#allocation3 + $0x68] sm:$0xf]
    %v82 = vld [vmem:[#allocation3 + $0x6c] sm:$0xf]
    %v83 = vld [vmem:[#allocation3 + $0x70] sm:$0xf]
    %v84 = vld [vmem:[#allocation3 + $0x74] sm:$0xf]
    %v85 = vld [vmem:[#allocation3 + $0x78] sm:$0xf]
    %v86 = vld [vmem:[#allocation3 + $0x7c] sm:$0xf]
    %v87 = vld [vmem:[#allocation3 + $0x80] sm:$0xf]
    %v88 = vld [vmem:[#allocation3 + $0x84] sm:$0xf]
    %v89 = vld [vmem:[#allocation3 + $0x88] sm:$0xf]
    %v90 = vld [vmem:[#allocation3 + $0x8c] sm:$0xf]
    %v91 = vld [vmem:[#allocation3 + $0x90] sm:$0xf]
    %v92 = vld [vmem:[#allocation3 + $0x94] sm:$0xf]
    %v93 = vld [vmem:[#allocation3 + $0x98] sm:$0xf]
    %v94 = vld [vmem:[#allocation3 + $0x9c] sm:$0xf]
    %v95 = vld [vmem:[#allocation3 + $0xa0] sm:$0xf]
    %v96 = vld [vmem:[#allocation3 + $0xa4] sm:$0xf]
    %v97 = vld [vmem:[#allocation3 + $0xa8] sm:$0xf]
    %v98 = vld [vmem:[#allocation3 + $0xac] sm:$0xf]
    %v99 = vld [vmem:[#allocation3 + $0xb0] sm:$0xf]
    %v100 = vld [vmem:[#allocation3 + $0xb4] sm:$0xf]
    %v101 = vld [vmem:[#allocation3 + $0xb8] sm:$0xf]
    %v102 = vld [vmem:[#allocation3 + $0xbc] sm:$0xf]
    %v103 = vld [vmem:[#allocation3 + $0xc0] sm:$0xf]
    %v104 = vld [vmem:[#allocation3 + $0xc4] sm:$0xf]
    %v105 = vld [vmem:[#allocation3 + $0xc8] sm:$0xf]
    %v106 = vld [vmem:[#allocation3 + $0xcc] sm:$0xf]
    %v107 = vld [vmem:[#allocation3 + $0xd0] sm:$0xf]
    %v108 = vld [vmem:[#allocation3 + $0xd4] sm:$0xf]
    %v109 = vld [vmem:[#allocation3 + $0xd8] sm:$0xf]
    %v110 = vld [vmem:[#allocation3 + $0xdc] sm:$0xf]
    %v111 = vld [vmem:[#allocation3 + $0xe0] sm:$0xf]
    %v112 = vld [vmem:[#allocation3 + $0xe4] sm:$0xf]
    %v113 = vld [vmem:[#allocation3 + $0xe8] sm:$0xf]
    %v114 = vld [vmem:[#allocation3 + $0xec] sm:$0xf]
    %v115 = vld [vmem:[#allocation3 + $0xf0] sm:$0xf]
    %v116 = vld [vmem:[#allocation3 + $0xf4] sm:$0xf]
    %v117 = vld [vmem:[#allocation3 + $0xf8] sm:$0xf]
    %v118 = vld [vmem:[#allocation3 + $0xfc] sm:$0xf]
    %v119 = vld [vmem:[#allocation3 + $0x100] sm:$0xf]
    %v120 = vld [vmem:[#allocation3 + $0x104] sm:$0xf]
    %v121 = vld [vmem:[#allocation3 + $0x108] sm:$0xf]
    %v122 = vld [vmem:[#allocation3 + $0x10c] sm:$0xf]
    %v123 = vld [vmem:[#allocation3 + $0x110] sm:$0xf]
    %v124 = vld [vmem:[#allocation3 + $0x114] sm:$0xf]
    %v125 = vld [vmem:[#allocation3 + $0x118] sm:$0xf]
    %v126 = vld [vmem:[#allocation3 + $0x11c] sm:$0xf]
    %v127 = vld [vmem:[#allocation3 + $0x120] sm:$0xf]
    %v128 = vld [vmem:[#allocation3 + $0x124] sm:$0xf]
    %v129 = vld [vmem:[#allocation3 + $0x128] sm:$0xf]
    %v130 = vld [vmem:[#allocation3 + $0x12c] sm:$0xf]
    %v131 = vld [vmem:[#allocation3 + $0x130] sm:$0xf]
    %v132 = vld [vmem:[#allocation3 + $0x134] sm:$0xf]
    %v133 = vld [vmem:[#allocation3 + $0x138] sm:$0xf]
    %v134 = vld [vmem:[#allocation3 + $0x13c] sm:$0xf]
    %v135 = vld [vmem:[#allocation3 + $0x140] sm:$0xf]
    %v136 = vld [vmem:[#allocation3 + $0x144] sm:$0xf]
    %v137 = vld [vmem:[#allocation3 + $0x148] sm:$0xf]
    %v138 = vld [vmem:[#allocation3 + $0x14c] sm:$0xf]
    %v139 = vld [vmem:[#allocation3 + $0x150] sm:$0xf]
    %v140 = vld [vmem:[#allocation3 + $0x154] sm:$0xf]
    %v141 = vld [vmem:[#allocation3 + $0x158] sm:$0xf]
    %v142 = vld [vmem:[#allocation3 + $0x15c] sm:$0xf]
    %v143 = vld [vmem:[#allocation3 + $0x160] sm:$0xf]
    %v144 = vld [vmem:[#allocation3 + $0x164] sm:$0xf]
    %v145 = vld [vmem:[#allocation3 + $0x168] sm:$0xf]
    %v146 = vld [vmem:[#allocation3 + $0x16c] sm:$0xf]
    %v147 = vld [vmem:[#allocation3 + $0x170] sm:$0xf]
    %v148 = vld [vmem:[#allocation3 + $0x174] sm:$0xf]
    %v149 = vld [vmem:[#allocation3 + $0x178] sm:$0xf]
    %v150 = vld [vmem:[#allocation3 + $0x17c] sm:$0xf]
    %v151 = vld [vmem:[#allocation3 + $0x180] sm:$0xf]
    %v152 = vld [vmem:[#allocation3 + $0x184] sm:$0xf]
    %v153 = vld [vmem:[%s2] sm:$0x1]
    %v155 = vperm.slane %v153, 0
    %v161 = vunpack.c.l.b16 %v51
    %v162 = vunpack.c.h.b16 %v51
    %v163 = vunpack.c.l.b16 %v52
    %v164 = vunpack.c.h.b16 %v52
    %v165 = vunpack.c.l.b16 %v53
    %v166 = vunpack.c.h.b16 %v53
    %v167 = vunpack.c.l.b16 %v54
    %v168 = vpack.c.b16 %v161, %v161
    %v169 = vpack.c.b16 %v162, %v162
    %v170 = vpack.c.b16 %v163, %v163
    %v171 = vpack.c.b16 %v164, %v164
    %v172 = vpack.c.b16 %v165, %v165
    %v173 = vpack.c.b16 %v166, %v166
    %v174 = vpack.c.b16 %v167, %v167
    %v279 = vunpack.c.l.b16 %v55
    %v280 = vunpack.c.l.b16 %v56
    %v281 = vunpack.c.l.b16 %v57
    %v282 = vunpack.c.l.b16 %v58
    %v283 = vunpack.c.l.b16 %v59
    %v284 = vunpack.c.l.b16 %v60
    %v285 = vunpack.c.l.b16 %v61
    %v286 = vunpack.c.l.b16 %v62
    %v287 = vunpack.c.l.b16 %v63
    %v288 = vunpack.c.l.b16 %v64
    %v289 = vunpack.c.l.b16 %v65
    %v290 = vunpack.c.l.b16 %v66
    %v291 = vunpack.c.l.b16 %v67
    %v292 = vunpack.c.l.b16 %v68
    %v293 = vunpack.c.l.b16 %v69
    %v294 = vunpack.c.l.b16 %v70
    %v295 = vunpack.c.l.b16 %v71
    %v296 = vunpack.c.l.b16 %v72
    %v297 = vunpack.c.l.b16 %v73
    %v298 = vunpack.c.l.b16 %v74
    %v299 = vunpack.c.l.b16 %v75
    %v300 = vunpack.c.l.b16 %v76
    %v301 = vunpack.c.l.b16 %v77
    %v302 = vunpack.c.l.b16 %v78
    %v303 = vunpack.c.l.b16 %v79
    %v304 = vunpack.c.l.b16 %v80
    %v305 = vunpack.c.l.b16 %v81
    %v306 = vunpack.c.l.b16 %v82
    %v307 = vunpack.c.l.b16 %v83
    %v308 = vunpack.c.l.b16 %v84
    %v309 = vunpack.c.l.b16 %v85
    %v310 = vunpack.c.l.b16 %v86
    %v311 = vunpack.c.l.b16 %v87
    %v312 = vunpack.c.l.b16 %v88
    %v313 = vunpack.c.l.b16 %v89
    %v314 = vunpack.c.l.b16 %v90
    %v315 = vunpack.c.l.b16 %v91
    %v316 = vunpack.c.l.b16 %v92
    %v317 = vunpack.c.l.b16 %v93
    %v318 = vunpack.c.l.b16 %v94
    %v319 = vunpack.c.l.b16 %v95
    %v320 = vunpack.c.l.b16 %v96
    %v321 = vunpack.c.l.b16 %v97
    %v322 = vunpack.c.l.b16 %v98
    %v323 = vunpack.c.l.b16 %v99
    %v324 = vunpack.c.l.b16 %v100
    %v325 = vunpack.c.l.b16 %v101
    %v326 = vunpack.c.l.b16 %v102
    %v327 = vunpack.c.l.b16 %v103
    %v328 = vunpack.c.l.b16 %v104
    %v329 = vunpack.c.l.b16 %v105
    %v330 = vunpack.c.l.b16 %v106
    %v331 = vunpack.c.l.b16 %v107
    %v332 = vunpack.c.l.b16 %v108
    %v333 = vunpack.c.l.b16 %v109
    %v334 = vunpack.c.l.b16 %v110
    %v335 = vunpack.c.l.b16 %v111
    %v336 = vunpack.c.l.b16 %v112
    %v337 = vunpack.c.l.b16 %v113
    %v338 = vunpack.c.l.b16 %v114
    %v339 = vunpack.c.l.b16 %v115
    %v340 = vunpack.c.l.b16 %v116
    %v341 = vunpack.c.l.b16 %v117
    %v342 = vunpack.c.l.b16 %v118
    %v343 = vunpack.c.l.b16 %v119
    %v344 = vunpack.c.l.b16 %v120
    %v345 = vunpack.c.l.b16 %v121
    %v346 = vunpack.c.l.b16 %v122
    %v347 = vunpack.c.l.b16 %v123
    %v348 = vunpack.c.l.b16 %v124
    %v349 = vunpack.c.l.b16 %v125
    %v350 = vunpack.c.l.b16 %v126
    %v351 = vunpack.c.l.b16 %v127
    %v352 = vunpack.c.l.b16 %v128
    %v353 = vunpack.c.l.b16 %v129
    %v354 = vunpack.c.l.b16 %v130
    %v355 = vunpack.c.l.b16 %v131
    %v356 = vunpack.c.l.b16 %v132
    %v357 = vunpack.c.l.b16 %v133
    %v358 = vunpack.c.l.b16 %v134
    %v359 = vunpack.c.l.b16 %v135
    %v360 = vunpack.c.l.b16 %v136
    %v361 = vunpack.c.l.b16 %v137
    %v362 = vunpack.c.l.b16 %v138
    %v363 = vunpack.c.l.b16 %v139
    %v364 = vunpack.c.l.b16 %v140
    %v365 = vunpack.c.l.b16 %v141
    %v366 = vunpack.c.l.b16 %v142
    %v367 = vunpack.c.l.b16 %v143
    %v368 = vunpack.c.l.b16 %v144
    %v369 = vunpack.c.l.b16 %v145
    %v370 = vunpack.c.l.b16 %v146
    %v371 = vunpack.c.l.b16 %v147
    %v372 = vunpack.c.l.b16 %v148
    %v373 = vunpack.c.l.b16 %v149
    %v374 = vunpack.c.l.b16 %v150
    %v375 = vunpack.c.l.b16 %v151
    %v376 = vunpack.c.l.b16 %v152
    %v377 = vpack.c.b16 %v280, %v279
    %v378 = vpack.c.b16 %v282, %v281
    %v379 = vpack.c.b16 %v284, %v283
    %v380 = vpack.c.b16 %v286, %v285
    %v381 = vpack.c.b16 %v288, %v287
    %v382 = vpack.c.b16 %v290, %v289
    %v383 = vpack.c.b16 %v292, %v291
    %v384 = vpack.c.b16 %v294, %v293
    %v385 = vpack.c.b16 %v296, %v295
    %v386 = vpack.c.b16 %v298, %v297
    %v387 = vpack.c.b16 %v300, %v299
    %v388 = vpack.c.b16 %v302, %v301
    %v389 = vpack.c.b16 %v304, %v303
    %v390 = vpack.c.b16 %v306, %v305
    %v391 = vpack.c.b16 %v308, %v307
    %v392 = vpack.c.b16 %v310, %v309
    %v393 = vpack.c.b16 %v312, %v311
    %v394 = vpack.c.b16 %v314, %v313
    %v395 = vpack.c.b16 %v316, %v315
    %v396 = vpack.c.b16 %v318, %v317
    %v397 = vpack.c.b16 %v320, %v319
    %v398 = vpack.c.b16 %v322, %v321
    %v399 = vpack.c.b16 %v324, %v323
    %v400 = vpack.c.b16 %v326, %v325
    %v401 = vpack.c.b16 %v328, %v327
    %v402 = vpack.c.b16 %v330, %v329
    %v403 = vpack.c.b16 %v332, %v331
    %v404 = vpack.c.b16 %v334, %v333
    %v405 = vpack.c.b16 %v336, %v335
    %v406 = vpack.c.b16 %v338, %v337
    %v407 = vpack.c.b16 %v340, %v339
    %v408 = vpack.c.b16 %v342, %v341
    %v409 = vpack.c.b16 %v344, %v343
    %v410 = vpack.c.b16 %v346, %v345
    %v411 = vpack.c.b16 %v348, %v347
    %v412 = vpack.c.b16 %v350, %v349
    %v413 = vpack.c.b16 %v352, %v351
    %v414 = vpack.c.b16 %v354, %v353
    %v415 = vpack.c.b16 %v356, %v355
    %v416 = vpack.c.b16 %v358, %v357
    %v417 = vpack.c.b16 %v360, %v359
    %v418 = vpack.c.b16 %v362, %v361
    %v419 = vpack.c.b16 %v364, %v363
    %v420 = vpack.c.b16 %v366, %v365
    %v421 = vpack.c.b16 %v368, %v367
    %v422 = vpack.c.b16 %v370, %v369
    %v423 = vpack.c.b16 %v372, %v371
    %v424 = vpack.c.b16 %v374, %v373
    %v425 = vpack.c.b16 %v376, %v375
    %vm475 = vcmask 130048
    %v477 = vsel %vm475, %v174, 0
    %479 = vmatpush.bf16.msra.mxu0 %v384
    %480 = vmatpush.bf16.msra.mxu0 %v383
    %481 = vmatpush.bf16.msra.mxu0 %v382
    %482 = vmatpush.bf16.msra.mxu0 %v381
    %483 = vmatpush.bf16.msra.mxu0 %v380
    %484 = vmatpush.bf16.msra.mxu0 %v379
    %485 = vmatpush.bf16.msra.mxu0 %v378
    %486 = vmatpush.bf16.msra.mxu0 %v377
    %487 = vmatmul.bf16.gmra.mxu0 %v168
    %v488 = vpop.f32.mrf.mxu0
    %v489 = vadd.f32 %v155, %v488
    %v490 = vpop.f32.mrf.mxu0
    %491 = vdwg.mxu0
    %492 = vmatpush.bf16.msra.mxu0 %v392
    %493 = vmatpush.bf16.msra.mxu0 %v391
    %494 = vmatpush.bf16.msra.mxu0 %v390
    %495 = vmatpush.bf16.msra.mxu0 %v389
    %496 = vmatpush.bf16.msra.mxu0 %v388
    %497 = vmatpush.bf16.msra.mxu0 %v387
    %498 = vmatpush.bf16.msra.mxu0 %v386
    %499 = vmatpush.bf16.msra.mxu0 %v385
    %500 = vmatmul.bf16.gmra.mxu0 %v169
    %v501 = vpop.f32.mrf.mxu0
    %v502 = vadd.f32 %v489, %v501
    %v503 = vpop.f32.mrf.mxu0
    %504 = vdwg.mxu0
    %505 = vmatpush.bf16.msra.mxu0 %v400
    %506 = vmatpush.bf16.msra.mxu0 %v399
    %507 = vmatpush.bf16.msra.mxu0 %v398
    %508 = vmatpush.bf16.msra.mxu0 %v397
    %509 = vmatpush.bf16.msra.mxu0 %v396
    %510 = vmatpush.bf16.msra.mxu0 %v395
    %511 = vmatpush.bf16.msra.mxu0 %v394
    %512 = vmatpush.bf16.msra.mxu0 %v393
    %513 = vmatmul.bf16.gmra.mxu0 %v170
    %v514 = vpop.f32.mrf.mxu0
    %v515 = vadd.f32 %v502, %v514
    %v516 = vpop.f32.mrf.mxu0
    %517 = vdwg.mxu0
    %518 = vmatpush.bf16.msra.mxu0 %v408
    %519 = vmatpush.bf16.msra.mxu0 %v407
    %520 = vmatpush.bf16.msra.mxu0 %v406
    %521 = vmatpush.bf16.msra.mxu0 %v405
    %522 = vmatpush.bf16.msra.mxu0 %v404
    %523 = vmatpush.bf16.msra.mxu0 %v403
    %524 = vmatpush.bf16.msra.mxu0 %v402
    %525 = vmatpush.bf16.msra.mxu0 %v401
    %526 = vmatmul.bf16.gmra.mxu0 %v171
    %v527 = vpop.f32.mrf.mxu0
    %v528 = vadd.f32 %v515, %v527
    %v529 = vpop.f32.mrf.mxu0
    %530 = vdwg.mxu0
    %531 = vmatpush.bf16.msra.mxu0 %v416
    %532 = vmatpush.bf16.msra.mxu0 %v415
    %533 = vmatpush.bf16.msra.mxu0 %v414
    %534 = vmatpush.bf16.msra.mxu0 %v413
    %535 = vmatpush.bf16.msra.mxu0 %v412
    %536 = vmatpush.bf16.msra.mxu0 %v411
    %537 = vmatpush.bf16.msra.mxu0 %v410
    %538 = vmatpush.bf16.msra.mxu0 %v409
    %539 = vmatmul.bf16.gmra.mxu0 %v172
    %v540 = vpop.f32.mrf.mxu0
    %v541 = vadd.f32 %v528, %v540
    %v542 = vpop.f32.mrf.mxu0
    %543 = vdwg.mxu0
    %544 = vmatpush.bf16.msra.mxu0 %v424
    %545 = vmatpush.bf16.msra.mxu0 %v423
    %546 = vmatpush.bf16.msra.mxu0 %v422
    %547 = vmatpush.bf16.msra.mxu0 %v421
    %548 = vmatpush.bf16.msra.mxu0 %v420
    %549 = vmatpush.bf16.msra.mxu0 %v419
    %550 = vmatpush.bf16.msra.mxu0 %v418
    %551 = vmatpush.bf16.msra.mxu0 %v417
    %552 = vmatmul.bf16.gmra.mxu0 %v173
    %v553 = vpop.f32.mrf.mxu0
    %v554 = vadd.f32 %v541, %v553
    %v555 = vpop.f32.mrf.mxu0
    %556 = vdwg.mxu0
    %557 = vmatpush.bf16.msra.mxu0 0
    %558 = vmatpush.bf16.msra.mxu0 0
    %559 = vmatpush.bf16.msra.mxu0 0
    %560 = vmatpush.bf16.msra.mxu0 0
    %561 = vmatpush.bf16.msra.mxu0 0
    %562 = vmatpush.bf16.msra.mxu0 0
    %563 = vmatpush.bf16.msra.mxu0 0
    %564 = vmatpush.bf16.msra.mxu0 %v425
    %565 = vmatmul.bf16.gmra.mxu0 %v477
    %v566 = vpop.f32.mrf.mxu0
    %v567 = vadd.f32 %v554, %v566
    %v568 = vpop.f32.mrf.mxu0
    %569 = vdwg.mxu0
    %vm570 = vcmp.gt.f32.partialorder %v567, 0.0
    %v571 = vmul.f32 %v567, 0.2
    %v572 = vsel %vm570, %v567, %v571
    %v573 = vpack.c.bf16 %v572, %v572
    %v574 = vld [vmem:[%s3] sm:$0xf]
    %v575 = vld [vmem:[%s3 + $0x4] sm:$0xf]
    %v576 = vld [vmem:[%s3 + $0x8] sm:$0xf]
    %v577 = vld [vmem:[%s3 + $0xc] sm:$0xf]
    %v578 = vld [vmem:[%s3 + $0x10] sm:$0xf]
    %v579 = vld [vmem:[%s3 + $0x14] sm:$0xf]
    %v580 = vld [vmem:[%s3 + $0x18] sm:$0xf]
    %v581 = vld [vmem:[%s3 + $0x1c] sm:$0xf]
    %v582 = vld [vmem:[%s3 + $0x20] sm:$0xf]
    %v583 = vld [vmem:[%s3 + $0x24] sm:$0xf]
    %v584 = vld [vmem:[%s3 + $0x28] sm:$0xf]
    %v585 = vld [vmem:[%s3 + $0x2c] sm:$0xf]
    %v586 = vld [vmem:[%s3 + $0x30] sm:$0xf]
    %v587 = vld [vmem:[%s3 + $0x34] sm:$0xf]
    %v588 = vld [vmem:[%s3 + $0x38] sm:$0xf]
    %v589 = vld [vmem:[%s3 + $0x3c] sm:$0xf]
    %v590 = vld [vmem:[%s4] sm:$0x1]
    %v592 = vperm.slane %v590, 0
    %v610 = vunpack.c.l.b16 %v574
    %v611 = vunpack.c.l.b16 %v575
    %v612 = vunpack.c.l.b16 %v576
    %v613 = vunpack.c.l.b16 %v577
    %v614 = vunpack.c.l.b16 %v578
    %v615 = vunpack.c.l.b16 %v579
    %v616 = vunpack.c.l.b16 %v580
    %v617 = vunpack.c.l.b16 %v581
    %v618 = vunpack.c.l.b16 %v582
    %v619 = vunpack.c.l.b16 %v583
    %v620 = vunpack.c.l.b16 %v584
    %v621 = vunpack.c.l.b16 %v585
    %v622 = vunpack.c.l.b16 %v586
    %v623 = vunpack.c.l.b16 %v587
    %v624 = vunpack.c.l.b16 %v588
    %v625 = vunpack.c.l.b16 %v589
    %v626 = vpack.c.b16 %v611, %v610
    %v627 = vpack.c.b16 %v613, %v612
    %v628 = vpack.c.b16 %v615, %v614
    %v629 = vpack.c.b16 %v617, %v616
    %v630 = vpack.c.b16 %v619, %v618
    %v631 = vpack.c.b16 %v621, %v620
    %v632 = vpack.c.b16 %v623, %v622
    %v633 = vpack.c.b16 %v625, %v624
    %642 = vmatpush.bf16.msra.mxu0 %v633
    %643 = vmatpush.bf16.msra.mxu0 %v632
    %644 = vmatpush.bf16.msra.mxu0 %v631
    %645 = vmatpush.bf16.msra.mxu0 %v630
    %646 = vmatpush.bf16.msra.mxu0 %v629
    %647 = vmatpush.bf16.msra.mxu0 %v628
    %648 = vmatpush.bf16.msra.mxu0 %v627
    %649 = vmatpush.bf16.msra.mxu0 %v626
    %650 = vmatmul.bf16.gmra.mxu0 %v573
    %v651 = vpop.f32.mrf.mxu0
    %v652 = vadd.f32 %v592, %v651
    %v653 = vpop.f32.mrf.mxu0
    %654 = vdwg.mxu0
    %vm655 = vcmp.gt.f32.partialorder %v652, 0.0
    %v656 = vmul.f32 %v652, 0.2
    %v657 = vsel %vm655, %v652, %v656
    %v658 = vpack.c.bf16 %v657, %v657
    %v659 = vld [vmem:[%s5] sm:$0xf]
    %v660 = vld [vmem:[%s5 + $0x4] sm:$0xf]
    %v661 = vld [vmem:[%s5 + $0x8] sm:$0xf]
    %v662 = vld [vmem:[%s5 + $0xc] sm:$0xf]
    %v663 = vld [vmem:[%s5 + $0x10] sm:$0xf]
    %v664 = vld [vmem:[%s5 + $0x14] sm:$0xf]
    %v665 = vld [vmem:[%s5 + $0x18] sm:$0xf]
    %v666 = vld [vmem:[%s5 + $0x1c] sm:$0xf]
    %v667 = vld [vmem:[%s6] sm:$0x1]
    %v669 = vperm.slane %v667, 0
    %v679 = vunpack.c.l.b16 %v659
    %v680 = vunpack.c.l.b16 %v660
    %v681 = vunpack.c.l.b16 %v661
    %v682 = vunpack.c.l.b16 %v662
    %v683 = vunpack.c.l.b16 %v663
    %v684 = vunpack.c.l.b16 %v664
    %v685 = vunpack.c.l.b16 %v665
    %v686 = vunpack.c.l.b16 %v666
    %v687 = vpack.c.b16 %v680, %v679
    %v688 = vpack.c.b16 %v682, %v681
    %v689 = vpack.c.b16 %v684, %v683
    %v690 = vpack.c.b16 %v686, %v685
    %vm695 = vcmask 523264
    %v697 = vsel %vm695, %v658, 0
    %699 = vmatpush.bf16.msra.mxu0 0
    %700 = vmatpush.bf16.msra.mxu0 0
    %701 = vmatpush.bf16.msra.mxu0 0
    %702 = vmatpush.bf16.msra.mxu0 0
    %703 = vmatpush.bf16.msra.mxu0 %v690
    %704 = vmatpush.bf16.msra.mxu0 %v689
    %705 = vmatpush.bf16.msra.mxu0 %v688
    %706 = vmatpush.bf16.msra.mxu0 %v687
    %707 = vmatmul.bf16.gmra.mxu0 %v697
    %v708 = vpop.f32.mrf.mxu0
    %v709 = vadd.f32 %v669, %v708
    %v710 = vpop.f32.mrf.mxu0
    %711 = vdwg.mxu0
    %vm712 = vcmp.gt.f32.partialorder %v709, 0.0
    %v713 = vmul.f32 %v709, 0.2
    %v714 = vsel %vm712, %v709, %v713
    %v715 = vld [vmem:[%s7] sm:$0x1]
    %v716 = vunpack.c.l.bf16 %v715
    %v717 = vperm.slane %v716, 0
    %v718 = vmul.f32 %v714, %v717
    %vm719 = vcmask 261120
    %v720 = vsel %vm719, %v718, 0.0
    %721 = vadd.xlane.f32.xlu0 %v720
    %v722 = vpop.xlane.xlu0 %721
    %v723 = vld [vmem:[#allocation2] sm:$0x1]
    %v725 = vperm.slane %v723, 0
    %v727 = vadd.f32 %v722, %v725
    %vm728 = vcmask 7168
    %729 = vst.msk [vmem:[%s9] sm:$0xff] %vm728, %v727
    // Predicated region
    $region42: #{tpu_custom_call.1} parent=1 // pred_check
      _
    $region43: #{tpu_custom_call.1} parent=1 // pred_check_branch
      %731 = sbr.rel (0) target = $region45
    $region44: #{tpu_custom_call.1} parent=1 // pred_region
      _
    $region45: #{tpu_custom_call.1} parent=1 // pred_fallthru
      _
    // Predicated region
    $region46: #{tpu_custom_call.1} parent=1 // pred_check
      _
    $region47: #{tpu_custom_call.1} parent=1 // pred_check_branch
      %733 = sbr.rel (0) target = $region49
    $region48: #{tpu_custom_call.1} parent=1 // pred_region
      _
    $region49: #{tpu_custom_call.1} parent=1 // pred_fallthru
      _
    %734 = vsyncpa [#allocation4], 1

</llo_original>
